<compile_context>
chip_gen: v7x
topology: tpu7x:2x2x1
jax: 0.10.0
libtpu: 0.0.40
codegen_flags: <defaults>
</compile_context>

<pallas_src>
import functools

import jax
import jax.numpy as jnp
from jax.experimental import pallas as pl
from jax.experimental.pallas import tpu as pltpu

_BN_EPS = 1e-5


def _round_up(x, m):
    return (x + m - 1) // m * m


def _vmem_limit_bytes():
    cap = 64 * 1024 * 1024  # conservative default = v7x per-TC VMEM
    try:
        info = pltpu.get_tpu_info()
        cap = int(getattr(info, "vmem_capacity_bytes", cap) or cap)
    except Exception:
        pass
    # leave headroom for compiler scratch; cap at ~100 MiB on 128 MiB parts
    return int(max(32 * 1024 * 1024,
                   min(cap - 8 * 1024 * 1024, 100 * 1024 * 1024)))


def _pick_tile_n(n, itemsize):
    """Row tile: lane/MXU friendly, low batch-padding waste, >=2 tiles when
    possible so v7x's two TensorCores both get work."""
    min_rows = 16 if itemsize < 4 else 8
    if n <= 128:
        return max(min_rows, _round_up(n, min_rows))
    best = None
    for t in (512, 256, 128):
        np_ = _round_up(n, t)
        key = (np_ - n, 0 if np_ // t >= 2 else 1, -t)
        if best is None or key < best[0]:
            best = (key, t)
    return best[1]


def _resnet_block_kernel(x_ref, w1_ref, b1_ref, w2_ref, b2_ref, alpha_ref,
                         o_ref, h_ref, *, resident_weights):
    """grid = (row_tiles, n_blocks).  One step applies one BN-folded ResnetBlock
    to one (tile_n, Dp) slab; the running activation h stays in VMEM scratch."""
    k = pl.program_id(1)
    last = pl.num_programs(1) - 1

    @pl.when(k == 0)
    def _():
        h_ref[...] = x_ref[...].astype(jnp.float32)

    h = h_ref[...]
    if resident_weights:
        w1, w2 = w1_ref[k], w2_ref[k]          # (Dp, Dp) slice of resident stack
        b1, b2 = b1_ref[k], b2_ref[k]          # (1, Dp)
    else:
        w1, w2 = w1_ref[...], w2_ref[...]      # streamed (Dp, Dp) per block step
        b1, b2 = b1_ref[...], b2_ref[...]      # (1, Dp)
    a1 = alpha_ref[k, 0]
    a2 = alpha_ref[k, 1]

    # Linear1 (eval-BN folded) + PReLU — bf16 MXU operands, f32 accumulation.
    y = jnp.dot(h.astype(w1.dtype), w1, preferred_element_type=jnp.float32) + b1
    y = jnp.where(y >= 0.0, y, a1 * y)
    # Linear2 (eval-BN folded) + PReLU
    y = jnp.dot(y.astype(w2.dtype), w2, preferred_element_type=jnp.float32) + b2
    y = jnp.where(y >= 0.0, y, a2 * y)

    h_new = h + y  # ResnetBlock skip connection: out = x + block(x)

    @pl.when(k < last)           # skip the scratch writeback on the final step
    def _():
        h_ref[...] = h_new

    @pl.when(k == last)
    def _():
        o_ref[...] = h_new.astype(o_ref.dtype)


def fold_bn_into_linear(raw, eps=_BN_EPS):
    """Fold eval-mode BatchNorm1d into the preceding Linear (torch layout:
    y = x @ W.T + b).  Returns weights in x @ W' layout plus folded biases."""
    def fold(w, b, gamma, beta, mean, var):
        s = gamma / jnp.sqrt(var + eps)                 # (n_blocks, dim)
        t = beta - mean * s
        w_f = jnp.swapaxes(w, -1, -2) * s[:, None, :]   # x @ (W.T * s)
        b_f = b * s + t
        return w_f, b_f

    w1, b1 = fold(raw["w1"], raw["b1"], raw["g1"], raw["be1"], raw["mu1"], raw["var1"])
    w2, b2 = fold(raw["w2"], raw["b2"], raw["g2"], raw["be2"], raw["mu2"], raw["var2"])
    return {"w1": w1, "b1": b1, "w2": w2, "b2": b2}


def resnet_blocks_forward(x, raw_params, *, tile_n=None,
                          weight_dtype=jnp.bfloat16, resident_weights=None):
    """Apply n_blocks ResnetBlocks sequentially (n_blocks=1 == the PyTorch module)."""
    N, D = x.shape
    n_blocks = raw_params["w1"].shape[0]
    folded = fold_bn_into_linear(raw_params)
    alpha = raw_params["alpha"].astype(jnp.float32)     # (n_blocks, 2) PReLU scalars

    itemsize = jnp.dtype(x.dtype).itemsize
    Dp = _round_up(D, 128)
    if tile_n is None:
        tile_n = _pick_tile_n(N, itemsize)
    else:
        min_rows = 16 if itemsize < 4 else 8
        tile_n = max(min_rows,
                     min(_round_up(tile_n, min_rows), _round_up(N, min_rows)))
    Np = _round_up(N, tile_n)
    row_tiles = Np // tile_n

    vmem_limit = _vmem_limit_bytes()
    w_itemsize = jnp.dtype(weight_dtype).itemsize
    w_stack_bytes = n_blocks * 2 * Dp * Dp * w_itemsize
    act_bytes = 5 * tile_n * Dp * 4            # x/out double-buffered + h scratch
    if resident_weights is None:
        # keep the whole weight stack resident if (conservatively 2x-buffered)
        # it plus activations fits in half the VMEM budget
        resident_weights = (2 * w_stack_bytes + act_bytes) <= vmem_limit // 2

    xp = jnp.zeros((Np, Dp), x.dtype).at[:N, :D].set(x)
    padw = lambda w: jnp.zeros((n_blocks, Dp, Dp), weight_dtype).at[:, :D, :D].set(
        w.astype(weight_dtype))
    padv = lambda v: jnp.zeros((n_blocks, 1, Dp), jnp.float32).at[:, 0, :D].set(
        v.astype(jnp.float32))
    w1, w2 = padw(folded["w1"]), padw(folded["w2"])
    b1, b2 = padv(folded["b1"]), padv(folded["b2"])

    if resident_weights:
        # Constant index_map: weight stack DMA'd once, reused across all grid steps.
        wspec = pl.BlockSpec((n_blocks, Dp, Dp), lambda i, k: (0, 0, 0))
        vspec = pl.BlockSpec((n_blocks, 1, Dp), lambda i, k: (0, 0, 0))
        w_stream_factor = 1
    else:
        # Stream one (Dp, Dp) weight pair per block step (double-buffered).
        wspec = pl.BlockSpec((pl.Squeezed(), Dp, Dp), lambda i, k: (k, 0, 0))
        vspec = pl.BlockSpec((pl.Squeezed(), 1, Dp), lambda i, k: (k, 0, 0))
        w_stream_factor = row_tiles

    row_spec = pl.BlockSpec((tile_n, Dp), lambda i, k: (i, 0))

    flops = 4 * Np * Dp * Dp * n_blocks
    bytes_accessed = (2 * Np * Dp * itemsize
                      + w_stream_factor * (w_stack_bytes + n_blocks * 2 * Dp * 4))
    cost = pl.CostEstimate(flops=flops, transcendentals=0,
                           bytes_accessed=bytes_accessed)

    kernel = functools.partial(_resnet_block_kernel,
                               resident_weights=resident_weights)

    out = pl.pallas_call(
        kernel,
        out_shape=jax.ShapeDtypeStruct((Np, Dp), x.dtype),
        grid=(row_tiles, n_blocks),
        in_specs=[
            row_spec,                                            # x (once per row tile)
            wspec,                                               # w1'
            vspec,                                               # b1'
            wspec,                                               # w2'
            vspec,                                               # b2'
            pl.BlockSpec(memory_space=pltpu.MemorySpace.SMEM),   # PReLU alphas
        ],
        out_specs=row_spec,
        scratch_shapes=[pltpu.VMEM((tile_n, Dp), jnp.float32)],  # resident h
        compiler_params=pltpu.CompilerParams(
            dimension_semantics=("parallel", "arbitrary"),
            vmem_limit_bytes=vmem_limit),
        cost_estimate=cost,
    )(xp, w1, b1, w2, b2, alpha)

    return out[:N, :D]


def init_params(key, n_blocks, dim, dtype=jnp.float32):
    """Synthetic per-block parameters matching the PyTorch module's shapes
    (torch Linear layout, non-trivial eval-mode BatchNorm buffers)."""
    ks = jax.random.split(key, 12)
    raw = {
        "w1": jax.random.normal(ks[0], (n_blocks, dim, dim), dtype) * 0.05,
        "b1": jax.random.normal(ks[1], (n_blocks, dim), dtype) * 0.01,
        "w2": jax.random.normal(ks[2], (n_blocks, dim, dim), dtype) * 0.05,
        "b2": jax.random.normal(ks[3], (n_blocks, dim), dtype) * 0.01,
        "g1": 1.0 + 0.1 * jax.random.normal(ks[4], (n_blocks, dim), dtype),
        "be1": 0.1 * jax.random.normal(ks[5], (n_blocks, dim), dtype),
        "mu1": 0.1 * jax.random.normal(ks[6], (n_blocks, dim), dtype),
        "var1": 1.0 + 0.5 * jax.random.uniform(ks[7], (n_blocks, dim), dtype),
        "g2": 1.0 + 0.1 * jax.random.normal(ks[8], (n_blocks, dim), dtype),
        "be2": 0.1 * jax.random.normal(ks[9], (n_blocks, dim), dtype),
        "mu2": 0.1 * jax.random.normal(ks[10], (n_blocks, dim), dtype),
        "var2": 1.0 + 0.5 * jax.random.uniform(ks[11], (n_blocks, dim), dtype),
        "alpha": jnp.full((n_blocks, 2), 0.25, dtype),   # PReLU default 0.25
    }
    return raw


def reference_forward(x, raw, eps=_BN_EPS):
    """Pure-JAX mirror of the PyTorch ResnetBlock(s) forward (eval-mode BN)."""
    h = x
    n_blocks = raw["w1"].shape[0]
    for k in range(n_blocks):
        y = h @ raw["w1"][k].T + raw["b1"][k]
        y = (y - raw["mu1"][k]) / jnp.sqrt(raw["var1"][k] + eps) * raw["g1"][k] + raw["be1"][k]
        y = jnp.where(y >= 0, y, raw["alpha"][k, 0] * y)
        y = y @ raw["w2"][k].T + raw["b2"][k]
        y = (y - raw["mu2"][k]) / jnp.sqrt(raw["var2"][k] + eps) * raw["g2"][k] + raw["be2"][k]
        y = jnp.where(y >= 0, y, raw["alpha"][k, 1] * y)
        h = h + y
    return h


if __name__ == "__main__":
    key = jax.random.PRNGKey(0)
    kx, kp1, kp3 = jax.random.split(key, 3)

    N, D = 16, 32
    x = jax.random.normal(kx, (N, D), jnp.float32)

    # 1) The original module: a single ResnetBlock (bf16 weights, resident path).
    raw1 = init_params(kp1, n_blocks=1, dim=D)
    out1 = jax.block_until_ready(resnet_blocks_forward(x, raw1))
    ref1 = reference_forward(x, raw1)
    assert out1.shape == (N, D) and out1.dtype == jnp.float32
    assert jnp.allclose(out1, ref1, atol=3e-2, rtol=3e-2), "single-block mismatch"

    # 2) A stack of 3 ResnetBlocks via the streamed-weight path (Squeezed specs).
    raw3 = init_params(kp3, n_blocks=3, dim=D)
    ref3 = reference_forward(x, raw3)
    out3s = jax.block_until_ready(
        resnet_blocks_forward(x, raw3, resident_weights=False))
    assert jnp.allclose(out3s, ref3, atol=5e-2, rtol=5e-2), "streamed-path mismatch"

    # 3) Same stack, f32 weights + resident path — bitwise-tight math check.
    out3r = jax.block_until_ready(
        resnet_blocks_forward(x, raw3, weight_dtype=jnp.float32,
                              resident_weights=True))
    assert jnp.allclose(out3r, ref3, atol=1e-4, rtol=1e-4), "resident/f32 mismatch"

    print("KERNEL_OK")
</pallas_src>

<mosaic_0001>
module attributes {stable_mosaic.version = 11 : i64} {
  func.func @_resnet_block_kernel(%arg0: i32, %arg1: i32, %arg2: memref<16x128xf32, #tpu.memory_space<vmem>>, %arg3: memref<1x128x128xbf16, #tpu.memory_space<vmem>>, %arg4: memref<1x1x128xf32, #tpu.memory_space<vmem>>, %arg5: memref<1x128x128xbf16, #tpu.memory_space<vmem>>, %arg6: memref<1x1x128xf32, #tpu.memory_space<vmem>>, %arg7: memref<1x2xf32, #tpu.memory_space<smem>>, %arg8: memref<16x128xf32, #tpu.memory_space<vmem>>, %arg9: memref<16x128xf32, #tpu.memory_space<vmem>>) attributes {dimension_semantics = [#tpu.dimension_semantics<parallel>, #tpu.dimension_semantics<arbitrary>], iteration_bounds = array<i64: 1, 1>, scalar_prefetch = 0 : i64, scratch_operands = 1 : i64, tpu.core_type = #tpu.core_type<tc>, window_params = [{transform_indices = @transform_0, window_bounds = array<i64: 16, 128>}, {pipeline_mode = #tpu.pipeline_mode<synchronous>, transform_indices = @transform_1, window_bounds = array<i64: 1, 128, 128>}, {pipeline_mode = #tpu.pipeline_mode<synchronous>, transform_indices = @transform_2, window_bounds = array<i64: 1, 1, 128>}, {pipeline_mode = #tpu.pipeline_mode<synchronous>, transform_indices = @transform_3, window_bounds = array<i64: 1, 128, 128>}, {pipeline_mode = #tpu.pipeline_mode<synchronous>, transform_indices = @transform_4, window_bounds = array<i64: 1, 1, 128>}, {transform_indices = @transform_5, window_bounds = array<i64: 1, 2>}, {transform_indices = @transform_6, window_bounds = array<i64: 16, 128>}]} {
    %c0_i32 = arith.constant 0 : i32
    %0 = arith.cmpi eq, %arg1, %c0_i32 : i32
    %1 = arith.extui %0 : i1 to i32
    %c0_i32_0 = arith.constant 0 : i32
    %2 = arith.cmpi ne, %1, %c0_i32_0 : i32
    scf.if %2 {
      %c0_18 = arith.constant 0 : index
      %c0_19 = arith.constant 0 : index
      %45 = vector.load %arg2[%c0_18, %c0_19] : memref<16x128xf32, #tpu.memory_space<vmem>>, vector<16x128xf32>
      %c0_20 = arith.constant 0 : index
      %c0_21 = arith.constant 0 : index
      %46 = vector.load %arg9[%c0_20, %c0_21] : memref<16x128xf32, #tpu.memory_space<vmem>>, vector<16x128xf32>
      tpu.vector_store %arg9[%c0_20, %c0_21], %45 {strides = array<i32>} : memref<16x128xf32, #tpu.memory_space<vmem>>, vector<16x128xf32>,
    } else {
    }
    %c0 = arith.constant 0 : index
    %c0_1 = arith.constant 0 : index
    %3 = vector.load %arg9[%c0, %c0_1] : memref<16x128xf32, #tpu.memory_space<vmem>>, vector<16x128xf32>
    %4 = arith.index_cast %arg1 : i32 to index
    %c0_2 = arith.constant 0 : index
    %c0_3 = arith.constant 0 : index
    %5 = vector.load %arg3[%4, %c0_2, %c0_3] : memref<1x128x128xbf16, #tpu.memory_space<vmem>>, vector<1x128x128xbf16>
    %6 = vector.shape_cast %5 : vector<1x128x128xbf16> to vector<128x128xbf16>
    %7 = arith.index_cast %arg1 : i32 to index
    %c0_4 = arith.constant 0 : index
    %c0_5 = arith.constant 0 : index
    %8 = vector.load %arg5[%7, %c0_4, %c0_5] : memref<1x128x128xbf16, #tpu.memory_space<vmem>>, vector<1x128x128xbf16>
    %9 = vector.shape_cast %8 : vector<1x128x128xbf16> to vector<128x128xbf16>
    %10 = arith.index_cast %arg1 : i32 to index
    %c0_6 = arith.constant 0 : index
    %c0_7 = arith.constant 0 : index
    %11 = vector.load %arg4[%10, %c0_6, %c0_7] : memref<1x1x128xf32, #tpu.memory_space<vmem>>, vector<1x1x128xf32>
    %12 = vector.shape_cast %11 : vector<1x1x128xf32> to vector<1x128xf32>
    %13 = arith.index_cast %arg1 : i32 to index
    %c0_8 = arith.constant 0 : index
    %c0_9 = arith.constant 0 : index
    %14 = vector.load %arg6[%13, %c0_8, %c0_9] : memref<1x1x128xf32, #tpu.memory_space<vmem>>, vector<1x1x128xf32>
    %15 = vector.shape_cast %14 : vector<1x1x128xf32> to vector<1x128xf32>
    %16 = arith.index_cast %arg1 : i32 to index
    %c0_10 = arith.constant 0 : index
    %17 = memref.load %arg7[%16, %c0_10] : memref<1x2xf32, #tpu.memory_space<smem>>
    %18 = arith.index_cast %arg1 : i32 to index
    %c1 = arith.constant 1 : index
    %19 = memref.load %arg7[%18, %c1] : memref<1x2xf32, #tpu.memory_space<smem>>
    %20 = arith.truncf %3 : vector<16x128xf32> to vector<16x128xbf16>
    %cst = arith.constant dense<0.000000e+00> : vector<16x128xf32>
    %21 = tpu.matmul %20, %6, %cst {dimension_numbers = #tpu.dot_dimension_numbers<[1], [0], [0], [1], [0, 0, 1, 1], [], []>} : vector<16x128xbf16>, vector<128x128xbf16>, vector<16x128xf32> -> vector<16x128xf32>
    %22 = vector.broadcast %12 : vector<1x128xf32> to vector<16x128xf32>
    %23 = arith.addf %21, %22 : vector<16x128xf32>
    %cst_11 = arith.constant 0.000000e+00 : f32
    %24 = vector.broadcast %cst_11 : f32 to vector<16x128xf32>
    %25 = arith.cmpf oge, %23, %24 : vector<16x128xf32>
    %26 = vector.broadcast %17 : f32 to vector<16x128xf32>
    %27 = arith.mulf %26, %23 : vector<16x128xf32>
    %28 = arith.select %25, %23, %27 : vector<16x128xi1>, vector<16x128xf32>
    %29 = arith.truncf %28 : vector<16x128xf32> to vector<16x128xbf16>
    %cst_12 = arith.constant dense<0.000000e+00> : vector<16x128xf32>
    %30 = tpu.matmul %29, %9, %cst_12 {dimension_numbers = #tpu.dot_dimension_numbers<[1], [0], [0], [1], [0, 0, 1, 1], [], []>} : vector<16x128xbf16>, vector<128x128xbf16>, vector<16x128xf32> -> vector<16x128xf32>
    %31 = vector.broadcast %15 : vector<1x128xf32> to vector<16x128xf32>
    %32 = arith.addf %30, %31 : vector<16x128xf32>
    %cst_13 = arith.constant 0.000000e+00 : f32
    %33 = vector.broadcast %cst_13 : f32 to vector<16x128xf32>
    %34 = arith.cmpf oge, %32, %33 : vector<16x128xf32>
    %35 = vector.broadcast %19 : f32 to vector<16x128xf32>
    %36 = arith.mulf %35, %32 : vector<16x128xf32>
    %37 = arith.select %34, %32, %36 : vector<16x128xi1>, vector<16x128xf32>
    %38 = arith.addf %3, %37 : vector<16x128xf32>
    %c0_i32_14 = arith.constant 0 : i32
    %39 = arith.cmpi slt, %arg1, %c0_i32_14 : i32
    %40 = arith.extui %39 : i1 to i32
    %c0_i32_15 = arith.constant 0 : i32
    %41 = arith.cmpi ne, %40, %c0_i32_15 : i32
    scf.if %41 {
      %c0_18 = arith.constant 0 : index
      %c0_19 = arith.constant 0 : index
      %45 = vector.load %arg9[%c0_18, %c0_19] : memref<16x128xf32, #tpu.memory_space<vmem>>, vector<16x128xf32>
      tpu.vector_store %arg9[%c0_18, %c0_19], %38 {strides = array<i32>} : memref<16x128xf32, #tpu.memory_space<vmem>>, vector<16x128xf32>,
    } else {
    }
    %c0_i32_16 = arith.constant 0 : i32
    %42 = arith.cmpi eq, %arg1, %c0_i32_16 : i32
    %43 = arith.extui %42 : i1 to i32
    %c0_i32_17 = arith.constant 0 : i32
    %44 = arith.cmpi ne, %43, %c0_i32_17 : i32
    scf.if %44 {
      %c0_18 = arith.constant 0 : index
      %c0_19 = arith.constant 0 : index
      %45 = vector.load %arg8[%c0_18, %c0_19] : memref<16x128xf32, #tpu.memory_space<vmem>>, vector<16x128xf32>
      tpu.vector_store %arg8[%c0_18, %c0_19], %38 {strides = array<i32>} : memref<16x128xf32, #tpu.memory_space<vmem>>, vector<16x128xf32>,
    } else {
    }
    return
  }
  func.func @transform_0(%arg0: i32, %arg1: i32) -> (i32, i32) {
    %c0_i32 = arith.constant 0 : i32
    %c0_i32_0 = arith.constant 0 : i32
    return %arg0, %c0_i32 : i32, i32
  }
  func.func @transform_1(%arg0: i32, %arg1: i32) -> (i32, i32, i32) {
    %c0_i32 = arith.constant 0 : i32
    %c0_i32_0 = arith.constant 0 : i32
    %c0_i32_1 = arith.constant 0 : i32
    %c0_i32_2 = arith.constant 0 : i32
    return %c0_i32, %c0_i32_0, %c0_i32_1 : i32, i32, i32
  }
  func.func @transform_2(%arg0: i32, %arg1: i32) -> (i32, i32, i32) {
    %c0_i32 = arith.constant 0 : i32
    %c0_i32_0 = arith.constant 0 : i32
    %c0_i32_1 = arith.constant 0 : i32
    %c0_i32_2 = arith.constant 0 : i32
    return %c0_i32, %c0_i32_0, %c0_i32_1 : i32, i32, i32
  }
  func.func @transform_3(%arg0: i32, %arg1: i32) -> (i32, i32, i32) {
    %c0_i32 = arith.constant 0 : i32
    %c0_i32_0 = arith.constant 0 : i32
    %c0_i32_1 = arith.constant 0 : i32
    %c0_i32_2 = arith.constant 0 : i32
    return %c0_i32, %c0_i32_0, %c0_i32_1 : i32, i32, i32
  }
  func.func @transform_4(%arg0: i32, %arg1: i32) -> (i32, i32, i32) {
    %c0_i32 = arith.constant 0 : i32
    %c0_i32_0 = arith.constant 0 : i32
    %c0_i32_1 = arith.constant 0 : i32
    %c0_i32_2 = arith.constant 0 : i32
    return %c0_i32, %c0_i32_0, %c0_i32_1 : i32, i32, i32
  }
  func.func @transform_5(%arg0: i32, %arg1: i32) -> (i32, i32) {
    %c0_i32 = arith.constant 0 : i32
    %c0_i32_0 = arith.constant 0 : i32
    %c0_i32_1 = arith.constant 0 : i32
    return %c0_i32, %c0_i32_0 : i32, i32
  }
  func.func @transform_6(%arg0: i32, %arg1: i32) -> (i32, i32) {
    %c0_i32 = arith.constant 0 : i32
    %c0_i32_0 = arith.constant 0 : i32
    return %arg0, %c0_i32 : i32, i32
  }
}

</mosaic_0001>

<llo_original>
// kernel: tpu_custom_call.1
$region0: #{tpu_custom_call.1}
  #allocation0 [shape = 'u32[]', space=smem, size = 0x4, offset = 0x4, fixed_abs, tag = 'smem constant byte address 0x4 - core index']
  #allocation1 [shape = 'u32[144,128]{1,0:T(1,128)}', space=vmem, size = 0x12000, scoped, tag = 'internal scratch']
  #allocation2 [shape = 'f32[16,128]{1,0:T(8,128)}', space=vmem, size = 0x2000, scoped, tag = 'scratch operand']
  %s0 = inlined_call_operand.hbm [shape: f32[16,128], index: 0, kind: input, shape index: {}]
  %s1 = inlined_call_operand.hbm [shape: bf16[1,128,128], index: 1, kind: input, shape index: {}]
  %s2 = inlined_call_operand.vmem [shape: f32[1,1,128], index: 2, kind: input, shape index: {}]
  %s3 = inlined_call_operand.hbm [shape: bf16[1,128,128], index: 3, kind: input, shape index: {}]
  %s4 = inlined_call_operand.vmem [shape: f32[1,1,128], index: 4, kind: input, shape index: {}]
  %s5 = inlined_call_operand.vmem [shape: f32[1,2], index: 5, kind: input, shape index: {}]
  %s6 = inlined_call_operand.hbm [shape: f32[16,128], index: 6, kind: output, shape index: {}]
  %s7 = sld [smem:[#allocation0]]
  $region62: #{tpu_custom_call.1} parent=0
    _
  %s9 = ssub.s32 1, %s7
  %s10 = scalar_select 0, %s9, %s7
  $region1: #{tpu_custom_call.1} parent=0
    #allocation3 [shape = 'u8[8192]{0}', space=vmem, size = 0x2000, scoped, tag = 'input window, operand 0, single buffered']
    #allocation4 [shape = 's32[1]{0}', space=sflag, size = 0x4, scoped, tag = 'scoped memory for tpu_custom_call.1']
    #allocation5 [shape = 's32[1]{0}', space=sflag, size = 0x4, scoped, tag = 'scoped memory for tpu_custom_call.1']
    #allocation6 [shape = 's32[1]{0}', space=sflag, size = 0x4, scoped, tag = 'scoped memory for tpu_custom_call.1']
    #allocation7 [shape = 'u8[32768]{0}', space=vmem, size = 0x8000, scoped, tag = 'input window, operand 1, single buffered']
    #allocation8 [shape = 's32[1]{0}', space=sflag, size = 0x4, scoped, tag = 'scoped memory for tpu_custom_call.1']
    #allocation9 [shape = 'u8[32768]{0}', space=vmem, size = 0x8000, scoped, tag = 'input window, operand 3, single buffered']
    #allocation10 [shape = 'u8[512]{0}', space=smem, size = 0x200, scoped, tag = 'input window, operand 5, single buffered']
    #allocation11 [shape = 'u8[8192]{0}', space=vmem, size = 0x2000, scoped, tag = 'output window, operand 0, single buffered']
    %11 = vsyncpa [#allocation4], 0
    %12 = vsyncpa [#allocation8], 0
    %13 = vsyncpa [#allocation6], 0
    %14 = vsyncpa [#allocation5], 0
    // Predicated region
    $region2: #{tpu_custom_call.1} parent=1 // pred_check
      _
    $region3: #{tpu_custom_call.1} parent=1 // pred_check_branch
      %16 = sbr.rel (0) target = $region5
    $region4: #{tpu_custom_call.1} parent=1 // pred_region
      %s18 = ssub.s32 256, 256
      %19 = vsyncadd [#allocation4], %s18
      %s20 = sshll.u32 [#allocation3], 4
      %s21 = int_to_ptr.vmem [resolvable:$true] %s20
      %26 = dma.hbm_to_vmem [thread:$0]  %s0, 256, %s21, [#allocation4], 128, 128, 8
    $region5: #{tpu_custom_call.1} parent=1 // pred_fallthru
      _
    // Predicated region
    $region6: #{tpu_custom_call.1} parent=1 // pred_check
      _
    $region7: #{tpu_custom_call.1} parent=1 // pred_check_branch
      %28 = sbr.rel (0) target = $region9
    $region8: #{tpu_custom_call.1} parent=1 // pred_region
      %s30 = ssub.s32 1024, 1024
      %31 = vsyncadd [#allocation8], %s30
      %s32 = sshll.u32 [#allocation7], 4
      %s33 = int_to_ptr.vmem [resolvable:$true] %s32
      %38 = dma.hbm_to_vmem [thread:$0]  %s1, 1024, %s33, [#allocation8], 64, 64, 4
    $region9: #{tpu_custom_call.1} parent=1 // pred_fallthru
      _
    // Predicated region
    $region10: #{tpu_custom_call.1} parent=1 // pred_check
      _
    $region11: #{tpu_custom_call.1} parent=1 // pred_check_branch
      %40 = sbr.rel (0) target = $region13
    $region12: #{tpu_custom_call.1} parent=1 // pred_region
      _
    $region13: #{tpu_custom_call.1} parent=1 // pred_fallthru
      _
    // Predicated region
    $region14: #{tpu_custom_call.1} parent=1 // pred_check
      _
    $region15: #{tpu_custom_call.1} parent=1 // pred_check_branch
      %42 = sbr.rel (0) target = $region17
    $region16: #{tpu_custom_call.1} parent=1 // pred_region
      %s44 = ssub.s32 1024, 1024
      %45 = vsyncadd [#allocation8], %s44
      %s46 = sshll.u32 [#allocation9], 4
      %s47 = int_to_ptr.vmem [resolvable:$true] %s46
      %52 = dma.hbm_to_vmem [thread:$0]  %s3, 1024, %s47, [#allocation8], 64, 64, 4
    $region17: #{tpu_custom_call.1} parent=1 // pred_fallthru
      _
    // Predicated region
    $region18: #{tpu_custom_call.1} parent=1 // pred_check
      _
    $region19: #{tpu_custom_call.1} parent=1 // pred_check_branch
      %54 = sbr.rel (0) target = $region21
    $region20: #{tpu_custom_call.1} parent=1 // pred_region
      _
    $region21: #{tpu_custom_call.1} parent=1 // pred_fallthru
      _
    // Predicated region
    $region22: #{tpu_custom_call.1} parent=1 // pred_check
      _
    $region23: #{tpu_custom_call.1} parent=1 // pred_check_branch
      %56 = sbr.rel (0) target = $region25
    $region24: #{tpu_custom_call.1} parent=1 // pred_region
      %s58 = ssub.s32 16, 16
      %59 = vsyncadd [#allocation6], %s58
      %s61 = sshll.u32 %s5, 4
      %s62 = int_to_ptr.vmem [resolvable:$true] %s61
      %64 = dma.vmem_to_smem %s62, 16, [#allocation10], [#allocation6]
    $region25: #{tpu_custom_call.1} parent=1 // pred_fallthru
      _
    // Predicated region
    $region26: #{tpu_custom_call.1} parent=1 // pred_check
      _
    $region27: #{tpu_custom_call.1} parent=1 // pred_check_branch
      %66 = sbr.rel (0) target = $region29
    $region28: #{tpu_custom_call.1} parent=1 // pred_region
      %67 = dma.done [#allocation4], 256
    $region29: #{tpu_custom_call.1} parent=1 // pred_fallthru
      _
    // Predicated region
    $region30: #{tpu_custom_call.1} parent=1 // pred_check
      _
    $region31: #{tpu_custom_call.1} parent=1 // pred_check_branch
      %69 = sbr.rel (0) target = $region33
    $region32: #{tpu_custom_call.1} parent=1 // pred_region
      %70 = dma.done [#allocation8], 1024
    $region33: #{tpu_custom_call.1} parent=1 // pred_fallthru
      _
    // Predicated region
    $region34: #{tpu_custom_call.1} parent=1 // pred_check
      _
    $region35: #{tpu_custom_call.1} parent=1 // pred_check_branch
      %72 = sbr.rel (0) target = $region37
    $region36: #{tpu_custom_call.1} parent=1 // pred_region
      %73 = dma.done [#allocation8], 1024
    $region37: #{tpu_custom_call.1} parent=1 // pred_fallthru
      _
    // Predicated region
    $region38: #{tpu_custom_call.1} parent=1 // pred_check
      _
    $region39: #{tpu_custom_call.1} parent=1 // pred_check_branch
      %75 = sbr.rel (0) target = $region41
    $region40: #{tpu_custom_call.1} parent=1 // pred_region
      %76 = dma.done [#allocation6], 16
    $region41: #{tpu_custom_call.1} parent=1 // pred_fallthru
      _
    %77 = sfence
    %p79 = scmp.eq.s32.totalorder 0, 0
    // Predicated region
    $region42: #{tpu_custom_call.1} parent=1 // pred_check
      %p80 = pneg %p79
    $region43: #{tpu_custom_call.1} parent=1 // pred_check_branch
      %82 = sbr.rel (%p80) target = $region45
    $region44: #{tpu_custom_call.1} parent=1 // pred_region
      %v83 = vld [vmem:[#allocation3] sm:$0xff]
      %v84 = vld [vmem:[#allocation3 + $0x8] sm:$0xff]
      %85 = vst [vmem:[#allocation2] sm:$0xff] %v83
      %86 = vst [vmem:[#allocation2 + $0x8] sm:$0xff] %v84
    $region45: #{tpu_custom_call.1} parent=1 // pred_fallthru
      _
    %v87 = vld [vmem:[#allocation2] sm:$0xff]
    %v88 = vld [vmem:[#allocation2 + $0x8] sm:$0xff]
    %s89 = smul.u32 0, 16
    %s90 = smul.addr %s89, 4
    %s91 = scalar_lea.vmem [#allocation7], %s90
    %v92 = vld [vmem:[%s91] sm:$0xf]
    %v93 = vld [vmem:[%s91 + $0x4] sm:$0xf]
    %v94 = vld [vmem:[%s91 + $0x8] sm:$0xf]
    %v95 = vld [vmem:[%s91 + $0xc] sm:$0xf]
    %v96 = vld [vmem:[%s91 + $0x10] sm:$0xf]
    %v97 = vld [vmem:[%s91 + $0x14] sm:$0xf]
    %v98 = vld [vmem:[%s91 + $0x18] sm:$0xf]
    %v99 = vld [vmem:[%s91 + $0x1c] sm:$0xf]
    %v100 = vld [vmem:[%s91 + $0x20] sm:$0xf]
    %v101 = vld [vmem:[%s91 + $0x24] sm:$0xf]
    %v102 = vld [vmem:[%s91 + $0x28] sm:$0xf]
    %v103 = vld [vmem:[%s91 + $0x2c] sm:$0xf]
    %v104 = vld [vmem:[%s91 + $0x30] sm:$0xf]
    %v105 = vld [vmem:[%s91 + $0x34] sm:$0xf]
    %v106 = vld [vmem:[%s91 + $0x38] sm:$0xf]
    %v107 = vld [vmem:[%s91 + $0x3c] sm:$0xf]
    %s108 = smul.addr %s89, 4
    %s109 = scalar_lea.vmem [#allocation9], %s108
    %v110 = vld [vmem:[%s109] sm:$0xf]
    %v111 = vld [vmem:[%s109 + $0x4] sm:$0xf]
    %v112 = vld [vmem:[%s109 + $0x8] sm:$0xf]
    %v113 = vld [vmem:[%s109 + $0xc] sm:$0xf]
    %v114 = vld [vmem:[%s109 + $0x10] sm:$0xf]
    %v115 = vld [vmem:[%s109 + $0x14] sm:$0xf]
    %v116 = vld [vmem:[%s109 + $0x18] sm:$0xf]
    %v117 = vld [vmem:[%s109 + $0x1c] sm:$0xf]
    %v118 = vld [vmem:[%s109 + $0x20] sm:$0xf]
    %v119 = vld [vmem:[%s109 + $0x24] sm:$0xf]
    %v120 = vld [vmem:[%s109 + $0x28] sm:$0xf]
    %v121 = vld [vmem:[%s109 + $0x2c] sm:$0xf]
    %v122 = vld [vmem:[%s109 + $0x30] sm:$0xf]
    %v123 = vld [vmem:[%s109 + $0x34] sm:$0xf]
    %v124 = vld [vmem:[%s109 + $0x38] sm:$0xf]
    %v125 = vld [vmem:[%s109 + $0x3c] sm:$0xf]
    %v126 = vld [vmem:[%s2] sm:$0x1]
    %v127 = vld [vmem:[%s4] sm:$0x1]
    %s128 = smul.u32 0, 128
    %s129 = sld [smem:[#allocation10 + %s128]]
    %s130 = sadd.s32 %s128, 1
    %s131 = sld [smem:[#allocation10 + %s130]]
    %v132 = vpack.c.bf16 %v88, %v87
    %v134 = vlaneseq
    %v135 = vshrl.u32 %v134, 7
    %v136 = vsub.s32 0, %v135
    %v137 = vrot.slane %v126, %v136
    %v155 = vunpack.c.l.b16 %v92
    %v156 = vunpack.c.l.b16 %v93
    %v157 = vunpack.c.l.b16 %v94
    %v158 = vunpack.c.l.b16 %v95
    %v159 = vunpack.c.l.b16 %v96
    %v160 = vunpack.c.l.b16 %v97
    %v161 = vunpack.c.l.b16 %v98
    %v162 = vunpack.c.l.b16 %v99
    %v163 = vunpack.c.l.b16 %v100
    %v164 = vunpack.c.l.b16 %v101
    %v165 = vunpack.c.l.b16 %v102
    %v166 = vunpack.c.l.b16 %v103
    %v167 = vunpack.c.l.b16 %v104
    %v168 = vunpack.c.l.b16 %v105
    %v169 = vunpack.c.l.b16 %v106
    %v170 = vunpack.c.l.b16 %v107
    %v171 = vpack.c.b16 %v156, %v155
    %v172 = vpack.c.b16 %v158, %v157
    %v173 = vpack.c.b16 %v160, %v159
    %v174 = vpack.c.b16 %v162, %v161
    %v175 = vpack.c.b16 %v164, %v163
    %v176 = vpack.c.b16 %v166, %v165
    %v177 = vpack.c.b16 %v168, %v167
    %v178 = vpack.c.b16 %v170, %v169
    %187 = vmatprep.subr.bf16.mxu0 0
    %188 = vmatpush1.bf16.msra.mxu0 %v171
    %189 = vmatprep.subr.bf16.mxu0 0
    %190 = vmatpush1.bf16.msra.mxu0 %v172
    %191 = vmatprep.subr.bf16.mxu0 0
    %192 = vmatpush1.bf16.msra.mxu0 %v173
    %193 = vmatprep.subr.bf16.mxu0 0
    %194 = vmatpush1.bf16.msra.mxu0 %v174
    %195 = vmatprep.subr.bf16.mxu0 0
    %196 = vmatpush1.bf16.msra.mxu0 %v175
    %197 = vmatprep.subr.bf16.mxu0 0
    %198 = vmatpush1.bf16.msra.mxu0 %v176
    %199 = vmatprep.subr.bf16.mxu0 0
    %200 = vmatpush1.bf16.msra.mxu0 %v177
    %201 = vmatprep.subr.bf16.mxu0 0
    %202 = vmatpush1.bf16.msra.mxu0 %v178
    %203 = vmatprep.subr.bf16.mxu0 0
    %204 = vmatpush1.bf16.msra.mxu0 0
    %205 = vmatprep.subr.bf16.mxu0 0
    %206 = vmatpush1.bf16.msra.mxu0 0
    %207 = vmatprep.subr.bf16.mxu0 0
    %208 = vmatpush1.bf16.msra.mxu0 0
    %209 = vmatprep.subr.bf16.mxu0 0
    %210 = vmatpush1.bf16.msra.mxu0 0
    %211 = vmatprep.subr.bf16.mxu0 0
    %212 = vmatpush1.bf16.msra.mxu0 0
    %213 = vmatprep.subr.bf16.mxu0 0
    %214 = vmatpush1.bf16.msra.mxu0 0
    %215 = vmatprep.subr.bf16.mxu0 0
    %216 = vmatpush1.bf16.msra.mxu0 0
    %217 = vmatprep.subr.bf16.mxu0 0
    %218 = vmatpush1.bf16.msra.mxu0 0
    %219 = vmatprep.mubr.bf16.mxu0 0
    %220 = vmatmul.mubr.bf16.gmra.mrb[0].mxu0 %v132
    %v221 = vpop.f32.mrb[0].mxu0
    %v222 = vadd.f32 %v137, %v221
    %v223 = vpop.f32.mrb[0].mxu0
    %v224 = vpop.f32.mrb[0].mxu0
    %v225 = vadd.f32 %v137, %v224
    %v226 = vpop.f32.mrb[0].mxu0
    %227 = vdwg.mxu0
    %vm228 = vcmp.ge.f32.partialorder %v222, 0.0
    %vm229 = vcmp.ge.f32.partialorder %v225, 0.0
    %v230 = vstv %s129
    %v231 = vmul.f32 %v230, %v222
    %v232 = vmul.f32 %v230, %v225
    %v233 = vsel %vm228, %v222, %v231
    %v234 = vsel %vm229, %v225, %v232
    %v235 = vpack.c.bf16 %v234, %v233
    %v237 = vlaneseq
    %v238 = vshrl.u32 %v237, 7
    %v239 = vsub.s32 0, %v238
    %v240 = vrot.slane %v127, %v239
    %v258 = vunpack.c.l.b16 %v110
    %v259 = vunpack.c.l.b16 %v111
    %v260 = vunpack.c.l.b16 %v112
    %v261 = vunpack.c.l.b16 %v113
    %v262 = vunpack.c.l.b16 %v114
    %v263 = vunpack.c.l.b16 %v115
    %v264 = vunpack.c.l.b16 %v116
    %v265 = vunpack.c.l.b16 %v117
    %v266 = vunpack.c.l.b16 %v118
    %v267 = vunpack.c.l.b16 %v119
    %v268 = vunpack.c.l.b16 %v120
    %v269 = vunpack.c.l.b16 %v121
    %v270 = vunpack.c.l.b16 %v122
    %v271 = vunpack.c.l.b16 %v123
    %v272 = vunpack.c.l.b16 %v124
    %v273 = vunpack.c.l.b16 %v125
    %v274 = vpack.c.b16 %v259, %v258
    %v275 = vpack.c.b16 %v261, %v260
    %v276 = vpack.c.b16 %v263, %v262
    %v277 = vpack.c.b16 %v265, %v264
    %v278 = vpack.c.b16 %v267, %v266
    %v279 = vpack.c.b16 %v269, %v268
    %v280 = vpack.c.b16 %v271, %v270
    %v281 = vpack.c.b16 %v273, %v272
    %290 = vmatprep.subr.bf16.mxu0 0
    %291 = vmatpush1.bf16.msra.mxu0 %v274
    %292 = vmatprep.subr.bf16.mxu0 0
    %293 = vmatpush1.bf16.msra.mxu0 %v275
    %294 = vmatprep.subr.bf16.mxu0 0
    %295 = vmatpush1.bf16.msra.mxu0 %v276
    %296 = vmatprep.subr.bf16.mxu0 0
    %297 = vmatpush1.bf16.msra.mxu0 %v277
    %298 = vmatprep.subr.bf16.mxu0 0
    %299 = vmatpush1.bf16.msra.mxu0 %v278
    %300 = vmatprep.subr.bf16.mxu0 0
    %301 = vmatpush1.bf16.msra.mxu0 %v279
    %302 = vmatprep.subr.bf16.mxu0 0
    %303 = vmatpush1.bf16.msra.mxu0 %v280
    %304 = vmatprep.subr.bf16.mxu0 0
    %305 = vmatpush1.bf16.msra.mxu0 %v281
    %306 = vmatprep.subr.bf16.mxu0 0
    %307 = vmatpush1.bf16.msra.mxu0 0
    %308 = vmatprep.subr.bf16.mxu0 0
    %309 = vmatpush1.bf16.msra.mxu0 0
    %310 = vmatprep.subr.bf16.mxu0 0
    %311 = vmatpush1.bf16.msra.mxu0 0
    %312 = vmatprep.subr.bf16.mxu0 0
    %313 = vmatpush1.bf16.msra.mxu0 0
    %314 = vmatprep.subr.bf16.mxu0 0
    %315 = vmatpush1.bf16.msra.mxu0 0
    %316 = vmatprep.subr.bf16.mxu0 0
    %317 = vmatpush1.bf16.msra.mxu0 0
    %318 = vmatprep.subr.bf16.mxu0 0
    %319 = vmatpush1.bf16.msra.mxu0 0
    %320 = vmatprep.subr.bf16.mxu0 0
    %321 = vmatpush1.bf16.msra.mxu0 0
    %322 = vmatprep.mubr.bf16.mxu0 0
    %323 = vmatmul.mubr.bf16.gmra.mrb[0].mxu0 %v235
    %v324 = vpop.f32.mrb[0].mxu0
    %v325 = vadd.f32 %v240, %v324
    %v326 = vpop.f32.mrb[0].mxu0
    %v327 = vpop.f32.mrb[0].mxu0
    %v328 = vadd.f32 %v240, %v327
    %v329 = vpop.f32.mrb[0].mxu0
    %330 = vdwg.mxu0
    %vm331 = vcmp.ge.f32.partialorder %v325, 0.0
    %vm332 = vcmp.ge.f32.partialorder %v328, 0.0
    %v333 = vstv %s131
    %v334 = vmul.f32 %v333, %v325
    %v335 = vmul.f32 %v333, %v328
    %v336 = vsel %vm331, %v325, %v334
    %v337 = vsel %vm332, %v328, %v335
    %v338 = vadd.f32 %v87, %v336
    %v339 = vadd.f32 %v88, %v337
    %p340 = scmp.lt.s32.totalorder 0, 0
    // Predicated region
    $region46: #{tpu_custom_call.1} parent=1 // pred_check
      %p341 = pneg %p340
    $region47: #{tpu_custom_call.1} parent=1 // pred_check_branch
      %343 = sbr.rel (%p341) target = $region49
    $region48: #{tpu_custom_call.1} parent=1 // pred_region
      %344 = vst [vmem:[#allocation2] sm:$0xff] %v338
      %345 = vst [vmem:[#allocation2 + $0x8] sm:$0xff] %v339
    $region49: #{tpu_custom_call.1} parent=1 // pred_fallthru
      _
    // Predicated region
    $region50: #{tpu_custom_call.1} parent=1 // pred_check
      %p346 = pneg %p79
    $region51: #{tpu_custom_call.1} parent=1 // pred_check_branch
      %348 = sbr.rel (%p346) target = $region53
    $region52: #{tpu_custom_call.1} parent=1 // pred_region
      %349 = vst [vmem:[#allocation11] sm:$0xff] %v338
      %350 = vst [vmem:[#allocation11 + $0x8] sm:$0xff] %v339
    $region53: #{tpu_custom_call.1} parent=1 // pred_fallthru
      _
    // Predicated region
    $region54: #{tpu_custom_call.1} parent=1 // pred_check
      _
    $region55: #{tpu_custom_call.1} parent=1 // pred_check_branch
      %352 = sbr.rel (0) target = $region57
    $region56: #{tpu_custom_call.1} parent=1 // pred_region
      %s354 = ssub.s32 256, 256
      %355 = vsyncadd [#allocation5], %s354
      %s356 = sshll.u32 [#allocation11], 4
      %s357 = int_to_ptr.vmem [resolvable:$true] %s356
      %362 = dma.vmem_to_hbm [thread:$0]  %s357, 256, %s6, [#allocation5], 128, 128, 8
    $region57: #{tpu_custom_call.1} parent=1 // pred_fallthru
      _
    // Predicated region
    $region58: #{tpu_custom_call.1} parent=1 // pred_check
      _
    $region59: #{tpu_custom_call.1} parent=1 // pred_check_branch
      %364 = sbr.rel (0) target = $region61
    $region60: #{tpu_custom_call.1} parent=1 // pred_region
      %365 = dma.done [#allocation5], 256
    $region61: #{tpu_custom_call.1} parent=1 // pred_fallthru
      _
    %366 = vsyncpa [#allocation4], 1
    %367 = vsyncpa [#allocation8], 1
    %368 = vsyncpa [#allocation5], 1
    %369 = vsyncpa [#allocation6], 1

</llo_original>
